<compile_context>
chip_gen: v7x
topology: tpu7x:2x2x1
jax: 0.10.0
libtpu: 0.0.40
codegen_flags: <defaults>
</compile_context>

<pallas_src>
import types
import numpy as np
import jax
import jax.numpy as jnp
from jax import lax
from jax.experimental import pallas as pl
from jax.experimental.pallas import tpu as pltpu


# --------------------------------------------------------------------------
# helpers
# --------------------------------------------------------------------------
def _round_up(x, m):
    return (x + m - 1) // m * m


def _num_tensorcores():
    """Best-effort TC count per device, clamped to [1, 2]; defaults to 1."""
    try:
        n = int(getattr(jax.devices()[0], "num_cores", 1))
        return max(1, min(2, n))
    except Exception:
        return 1


def _to_planes(x, rows_pad):
    """Channels-last (..., C) -> lane-dense planes (dtype preserved).

    C == 1 : (rows_pad, 128)
    C  > 1 : (C, rows_pad, 128)   (channel planes on an untiled leading dim)
    Pixel dim zero-padded only when needed; padded pixels contribute exactly 0
    to every accumulated quantity (diff == 0 and all masks == 0 there).
    """
    C = x.shape[-1]
    R = x.size // C
    Rp = rows_pad * 128
    if C == 1:
        flat = x.reshape(R)
        if Rp != R:
            flat = jnp.pad(flat, (0, Rp - R))
        return flat.reshape(rows_pad, 128)
    # TODO(synk): planar transpose of multi-channel images/masks is a full XLA
    # copy; upstream planar (or narrower-dtype) layouts would remove it.
    t = x.reshape(R, C).T
    if Rp != R:
        t = jnp.pad(t, ((0, 0), (0, Rp - R)))
    return t.reshape(C, rows_pad, 128)


# --------------------------------------------------------------------------
# fused pixel pass: mask construction + all pixel reductions in one sweep.
# Accumulated quantities (folded to (8,128) per step, resident (6,8,128)):
#   0: sum |pd_alpha - gt_alpha| * image_mask
#   1: sum_c |pd_img  - gt_img | * image_mask
#   2: sum_c (pd_img  - gt_img)^2              (unmasked, for PSNR)
#   3: sum   |pd_depth- gt_depth| * depth_mask
#   4: sum image_mask
#   5: sum depth_mask
# --------------------------------------------------------------------------
def fused_pixel_losses(gt_masks, gt_depths, gt_images, pd_images,
                       pd_alphas, pd_depths, *, only_sup_foreground=True,
                       model_midground=False, tile_rows=1024, ncores=None):
    """Single streaming pass over all pixels.

    Returns (totals[6], gt_alphas, gt_alphas_close, image_loss_mask,
    depth_loss_mask) with the masks shaped (B, N, H, W, 1) float32.
    """
    if ncores is None:
        ncores = _num_tensorcores()

    B, N, H, W, _ = gt_images.shape
    R = B * N * H * W
    rows = -(-R // 128)                                   # 128 pixels per row
    # adaptive tile so rows_pad overshoots by < one tile (minimal padding)
    tr = min(tile_rows, max(8, _round_up(-(-rows // ncores), 8)))
    inner = -(-rows // (ncores * tr))
    rows_pad = ncores * inner * tr

    gm = _to_planes(gt_masks, rows_pad)     # (4, rows_pad, 128)
    gd = _to_planes(gt_depths, rows_pad)    # (rows_pad, 128)
    gti = _to_planes(gt_images, rows_pad)   # (3, rows_pad, 128)
    pdi = _to_planes(pd_images, rows_pad)   # (3, rows_pad, 128)
    pda = _to_planes(pd_alphas, rows_pad)   # (rows_pad, 128)
    pdd = _to_planes(pd_depths, rows_pad)   # (rows_pad, 128)

    def kernel(gm_ref, gd_ref, gti_ref, pdi_ref, pda_ref, pdd_ref,
               sums_ref, alpha_ref, close_ref, imask_ref, dmask_ref):
        i = pl.program_id(1)

        @pl.when(i == 0)
        def _():
            sums_ref[...] = jnp.zeros_like(sums_ref)

        gm_ = gm_ref[...].astype(jnp.float32)    # (4, tr, 128) mask planes
        gd_ = gd_ref[...].astype(jnp.float32)    # (tr, 128)
        gti_ = gti_ref[...].astype(jnp.float32)  # (3, tr, 128)
        pdi_ = pdi_ref[...].astype(jnp.float32)  # (3, tr, 128)
        pda_ = pda_ref[...].astype(jnp.float32)  # (tr, 128)
        pdd_ = pdd_ref[...].astype(jnp.float32)  # (tr, 128)

        fg_seg, dyn, pad_hood, fg_grid = gm_[0], gm_[1], gm_[2], gm_[3]
        close = fg_seg * fg_grid
        if model_midground:
            mid = fg_seg - close
            alphas = jnp.logical_or(close != 0.0, mid != 0.0).astype(jnp.float32)
        else:
            alphas = (close != 0.0).astype(jnp.float32)
        if only_sup_foreground:
            img_mask = pad_hood * dyn * alphas
        else:
            img_mask = pad_hood * dyn
        depth_mask = pad_hood * dyn * alphas * (gd_ > 0.0).astype(jnp.float32)

        # lane-dense mask writebacks (needed for the vis dict)
        alpha_ref[...] = alphas
        close_ref[...] = close
        imask_ref[...] = img_mask
        dmask_ref[...] = depth_mask

        def fold(x):                         # (tr,128) -> (8,128), VPU adds
            return jnp.sum(x.reshape(x.shape[0] // 8, 8, 128), axis=0)

        idiff = pdi_ - gti_                                   # (3, tr, 128)
        abs_sum = jnp.sum(jnp.abs(idiff), axis=0)             # (tr, 128)
        sq_sum = jnp.sum(idiff * idiff, axis=0)               # (tr, 128)

        sums_ref[0] += fold(jnp.abs(pda_ - alphas) * img_mask)
        sums_ref[1] += fold(abs_sum * img_mask)
        sums_ref[2] += fold(sq_sum)
        sums_ref[3] += fold(jnp.abs(pdd_ - gd_) * depth_mask)
        sums_ref[4] += fold(img_mask)
        sums_ref[5] += fold(depth_mask)

    rows_idx = lambda c, i: (c * inner + i, 0)
    ch_idx = lambda c, i: (0, c * inner + i, 0)
    sums_idx = lambda c, i: (c, 0, 0)

    sums, alphas, close, imask, dmask = pl.pallas_call(
        kernel,
        out_shape=[
            jax.ShapeDtypeStruct((ncores * 6, 8, 128), jnp.float32),  # tiny acc
            jax.ShapeDtypeStruct((rows_pad, 128), jnp.float32),       # gt_alphas
            jax.ShapeDtypeStruct((rows_pad, 128), jnp.float32),       # close
            jax.ShapeDtypeStruct((rows_pad, 128), jnp.float32),       # image mask
            jax.ShapeDtypeStruct((rows_pad, 128), jnp.float32),       # depth mask
        ],
        grid_spec=pltpu.PrefetchScalarGridSpec(
            num_scalar_prefetch=0,
            grid=(ncores, inner),                  # reduction axis last
            in_specs=[
                pl.BlockSpec((4, tr, 128), ch_idx),     # gt mask planes
                pl.BlockSpec((tr, 128), rows_idx),      # gt depth
                pl.BlockSpec((3, tr, 128), ch_idx),     # gt image planes
                pl.BlockSpec((3, tr, 128), ch_idx),     # pd image planes
                pl.BlockSpec((tr, 128), rows_idx),      # pd alpha
                pl.BlockSpec((tr, 128), rows_idx),      # pd depth
            ],
            out_specs=[
                pl.BlockSpec((6, 8, 128), sums_idx),    # resident accumulator
                pl.BlockSpec((tr, 128), rows_idx),
                pl.BlockSpec((tr, 128), rows_idx),
                pl.BlockSpec((tr, 128), rows_idx),
                pl.BlockSpec((tr, 128), rows_idx),
            ],
        ),
        compiler_params=pltpu.CompilerParams(
            dimension_semantics=("parallel", "arbitrary"),
            vmem_limit_bytes=40 * 1024 * 1024),
    )(gm, gd, gti, pdi, pda, pdd)

    # trivially small final reduce: (ncores, 6, 8, 128) -> (6,)
    totals = jnp.sum(sums.reshape(ncores, 6, 8, 128), axis=(0, 2, 3))

    def back(p):
        flat = p.reshape(-1)
        if flat.shape[0] != R:
            flat = flat[:R]
        return flat.reshape(B, N, H, W, 1)

    return totals, back(alphas), back(close), back(imask), back(dmask)


# --------------------------------------------------------------------------
# gaussian per-feature sum / max / min, natural (M, D) layout, tiled over M
# --------------------------------------------------------------------------
def gaussian_stats(gaussians, tile_m=4096):
    """Per-feature sum/max/min over the M gaussians.  Returns three (D,) arrays."""
    M, D = gaussians.shape
    tm = min(tile_m, max(8, _round_up(M, 8)))
    grid_m = -(-M // tm)                       # ragged last block masked in-kernel

    def kernel(g_ref, sum_ref, max_ref, min_ref):
        i = pl.program_id(0)

        @pl.when(i == 0)
        def _():
            sum_ref[...] = jnp.zeros_like(sum_ref)
            max_ref[...] = jnp.full(max_ref.shape, -jnp.inf, max_ref.dtype)
            min_ref[...] = jnp.full(min_ref.shape, jnp.inf, min_ref.dtype)

        blk = g_ref[...].astype(jnp.float32)                   # (tm, D)
        row = i * tm + lax.broadcasted_iota(jnp.int32, blk.shape, 0)
        valid = row < M                                         # ragged tail

        def fold(fill, red):                 # (tm, D) -> (8, D)
            y = jnp.where(valid, blk, fill).reshape(tm // 8, 8, D)
            return red(y, axis=0)

        sum_ref[...] += fold(0.0, jnp.sum)
        max_ref[...] = jnp.maximum(max_ref[...], fold(-jnp.inf, jnp.max))
        min_ref[...] = jnp.minimum(min_ref[...], fold(jnp.inf, jnp.min))

    sums, maxs, mins = pl.pallas_call(
        kernel,
        out_shape=[jax.ShapeDtypeStruct((8, D), jnp.float32)] * 3,
        grid_spec=pltpu.PrefetchScalarGridSpec(
            num_scalar_prefetch=0,
            grid=(grid_m,),
            in_specs=[pl.BlockSpec((tm, D), lambda i: (i, 0))],
            out_specs=[pl.BlockSpec((8, D), lambda i: (0, 0))] * 3,
        ),
        compiler_params=pltpu.CompilerParams(
            dimension_semantics=("arbitrary",),
            vmem_limit_bytes=40 * 1024 * 1024),
    )(gaussians)
    return jnp.sum(sums, axis=0), jnp.max(maxs, axis=0), jnp.min(mins, axis=0)


# --------------------------------------------------------------------------
# UnifiedLoss forward (JAX/Pallas)
# --------------------------------------------------------------------------
def make_default_hparams(H, W):
    hp = types.SimpleNamespace()
    hp.supervise_image_resize = [H, W]          # no resize path exercised
    hp.supervision = types.SimpleNamespace(
        render_weight=1.0, alpha_weight=1.0, depth_weight=1.0,
        depth_supervision_format='l1', z_near=0.1, z_far=100.0)
    hp.perceptual_weight = 0.0                  # disables LPIPS(vgg)
    hp.perceptual_start_epoch = 0
    hp.with_render_branch = True
    hp.use_alex_metric = False                  # disables LPIPS(alex)
    hp.pixel_loss = 'l1'
    hp.render_alpha = True
    hp.use_sup_depth = True
    hp.sup_depth_type = 'lidar_depth'
    hp.use_ssim_loss = False
    hp.only_sup_foreground = True
    hp.model_midground = False
    hp.log_gaussian_stats = True
    return hp


def _safe_div(num, den):
    # Reference would produce NaN/inf if the mask sums to zero; guard it.
    return jnp.where(den > 0, num / jnp.maximum(den, 1e-12), 0.0)


def unified_loss_forward(batch, renderer_output, network_output, hparams,
                         global_step=0, current_epoch=0, compute_metric=True,
                         optimizer_idx=0):
    loss_dict = {}      # name -> (value, weight)
    metric_dict = {}
    latent_dict = {}

    # ---- prepare_resized_gt (no resize: supervise_image_resize == (H, W)) ----
    gt_images = batch['images']
    gt_masks = batch['images_mask']
    # TODO(synk): antialiased-bilinear / nearest-exact resize branches of
    # prepare_resized_gt are not implemented (supervise_image_resize == (H, W)).
    if hparams.use_sup_depth:
        if hparams.sup_depth_type == 'lidar_depth':
            gt_depths = batch['images_depth_lidar']
        else:
            # TODO(synk): other sup_depth_type sources / inverse-depth handling.
            raise NotImplementedError(hparams.sup_depth_type)
    else:
        gt_depths = jnp.zeros(gt_images.shape[:-1] + (1,), jnp.float32)

    pd_images = renderer_output['pd_images']
    pd_alphas = renderer_output['pd_alphas']
    pd_depths = renderer_output['pd_depths']
    if pd_depths is None:
        pd_depths = jnp.zeros_like(gt_depths)

    # single fused streaming pass: masks + all pixel-level reductions
    (totals, gt_alphas, gt_alphas_close, image_loss_mask,
     depth_loss_mask) = fused_pixel_losses(
        gt_masks, gt_depths, gt_images, pd_images, pd_alphas, pd_depths,
        only_sup_foreground=hparams.only_sup_foreground,
        model_midground=hparams.model_midground)
    alpha_l1, render_l1, render_sq, depth_l1, img_ms, depth_ms = (
        totals[0], totals[1], totals[2], totals[3], totals[4], totals[5])

    # vis glue (pure bookkeeping; gt_alphas_close comes straight from the kernel)
    if hparams.model_midground:
        fg_seg = gt_masks[..., 0:1].astype(jnp.float32)
        gt_alphas_midground = fg_seg - gt_alphas_close
    else:
        gt_alphas_midground = jnp.zeros_like(gt_alphas_close)
    vis_images_dict = {
        'gt_images': gt_images, 'pd_images': pd_images,
        'gt_alphas': gt_alphas, 'gt_alphas_close': gt_alphas_close,
        'gt_alphas_midground': gt_alphas_midground,
        'pd_alphas': pd_alphas,
        'pd_images_fg': renderer_output['pd_images_fg'],
        'image_loss_mask': image_loss_mask,
    }
    if hparams.use_sup_depth:
        vis_images_dict['gt_depths'] = gt_depths
        vis_images_dict['pd_depths'] = pd_depths
        vis_images_dict['depth_loss_mask'] = depth_loss_mask

    if optimizer_idx == 0:
        # ---- alpha loss -----------------------------------------------------
        if hparams.render_alpha and hparams.supervision.alpha_weight > 0.0:
            loss_dict['alpha'] = (_safe_div(alpha_l1, img_ms),
                                  hparams.supervision.alpha_weight)

        # ---- render (pixel) loss --------------------------------------------
        if hparams.with_render_branch:
            # sum over all 3 channels of |diff|*mask, normalized by the
            # single-channel mask sum (matches the PyTorch broadcast semantics).
            loss_dict['render'] = (_safe_div(render_l1, img_ms),
                                   hparams.supervision.render_weight)
            # TODO(synk): LPIPS(vgg/alex) perceptual losses and SSIM have no
            # Pallas equivalent here (perceptual_weight=0, use_ssim_loss=False,
            # use_alex_metric=False in this config).
            if compute_metric:
                mse = render_sq / pd_images.size
                metric_dict['PSNR'] = 20.0 * jnp.log10(1.0 / jnp.sqrt(mse))

        # ---- depth loss -------------------------------------------------------
        if hparams.use_sup_depth and hparams.supervision.depth_weight > 0:
            fmt = hparams.supervision.depth_supervision_format
            if fmt == 'l1':
                depth_loss = _safe_div(depth_l1, depth_ms)
            elif fmt == 'weight':
                scale = hparams.supervision.z_far - hparams.supervision.z_near
                depth_loss = _safe_div(depth_l1, depth_ms) / scale
            else:
                # TODO(synk): 'affine_invariant' / 'inverse_metric_depth' depth
                # formats are not covered by the fused kernel.
                raise NotImplementedError(fmt)
            loss_dict['disparity'] = (depth_loss, hparams.supervision.depth_weight)

        # ---- gaussian stats ---------------------------------------------------
        if getattr(hparams, 'log_gaussian_stats', True):
            gaussians = network_output['decoded_gaussians'][0]      # (M, D)
            Mg = gaussians.shape[0]
            gsum, gmax, gmin = gaussian_stats(gaussians)
            metric_dict['scaling-mean'] = jnp.sum(gsum[3:6]) / (3.0 * Mg)
            metric_dict['scaling-max'] = jnp.max(gmax[3:6])
            metric_dict['scaling-min'] = jnp.min(gmin[3:6])
            metric_dict['opacities-mean'] = gsum[10] / Mg
            metric_dict['opacities-max'] = gmax[10]
            metric_dict['opacities-min'] = gmin[10]

    return loss_dict, metric_dict, latent_dict, vis_images_dict


# --------------------------------------------------------------------------
if __name__ == "__main__":
    B, N, H, W = 2, 2, 16, 16
    M, D = 256, 14        # gaussians: xyz(3) scaling(3) rot(4) opacity(1) rgb(3)

    key = jax.random.PRNGKey(0)
    ks = jax.random.split(key, 8)
    gt_images = jax.random.uniform(ks[0], (B, N, H, W, 3), jnp.float32)
    gt_masks = (jax.random.uniform(ks[1], (B, N, H, W, 4)) > 0.3).astype(jnp.float32)
    gt_depths = jax.random.uniform(ks[2], (B, N, H, W, 1), jnp.float32, 0.0, 10.0)
    pd_images = jax.random.uniform(ks[3], (B, N, H, W, 3), jnp.float32)
    pd_alphas = jax.random.uniform(ks[4], (B, N, H, W, 1), jnp.float32)
    pd_depths = jax.random.uniform(ks[5], (B, N, H, W, 1), jnp.float32, 0.0, 10.0)
    pd_images_fg = jax.random.uniform(ks[6], (B, N, H, W, 3), jnp.float32)
    decoded_gaussians = [jax.random.normal(ks[7], (M, D), jnp.float32) * 0.1]

    batch = {'images': gt_images, 'images_mask': gt_masks,
             'images_depth_lidar': gt_depths}
    renderer_output = {'pd_images': pd_images, 'pd_alphas': pd_alphas,
                       'pd_depths': pd_depths, 'pd_images_fg': pd_images_fg}
    network_output = {'decoded_gaussians': decoded_gaussians}

    hparams = make_default_hparams(H, W)
    loss_dict, metric_dict, latent_dict, vis = unified_loss_forward(
        batch, renderer_output, network_output, hparams,
        global_step=0, current_epoch=0, compute_metric=True, optimizer_idx=0)
    jax.block_until_ready((loss_dict, metric_dict))

    # ---- lightweight correctness check against a pure-JAX reference --------
    fg_seg_r, dyn_r, pad_r, fg_grid_r = [gt_masks[..., c:c + 1] for c in range(4)]
    close_exp = fg_seg_r * fg_grid_r
    alphas_exp = (close_exp != 0).astype(jnp.float32)
    imask_exp = pad_r * dyn_r * alphas_exp
    dmask_exp = imask_exp * (gt_depths > 0).astype(jnp.float32)
    alpha_exp = jnp.sum(jnp.abs(pd_alphas - alphas_exp) * imask_exp) / jnp.sum(imask_exp)
    render_exp = jnp.sum(jnp.abs(pd_images - gt_images) * imask_exp) / jnp.sum(imask_exp)
    depth_exp = jnp.sum(jnp.abs(pd_depths - gt_depths) * dmask_exp) / jnp.sum(dmask_exp)
    psnr_exp = 20.0 * jnp.log10(1.0 / jnp.sqrt(jnp.mean((pd_images - gt_images) ** 2)))

    np.testing.assert_allclose(loss_dict['alpha'][0], alpha_exp, rtol=1e-4, atol=1e-5)
    np.testing.assert_allclose(loss_dict['render'][0], render_exp, rtol=1e-4, atol=1e-5)
    np.testing.assert_allclose(loss_dict['disparity'][0], depth_exp, rtol=1e-4, atol=1e-5)
    np.testing.assert_allclose(metric_dict['PSNR'], psnr_exp, rtol=1e-4, atol=1e-4)
    np.testing.assert_allclose(vis['gt_alphas'], alphas_exp, rtol=0, atol=1e-6)
    np.testing.assert_allclose(vis['gt_alphas_close'], close_exp, rtol=0, atol=1e-6)
    np.testing.assert_allclose(vis['image_loss_mask'], imask_exp, rtol=0, atol=1e-6)
    np.testing.assert_allclose(vis['depth_loss_mask'], dmask_exp, rtol=0, atol=1e-6)

    g0 = decoded_gaussians[0]
    np.testing.assert_allclose(metric_dict['scaling-mean'], jnp.mean(g0[:, 3:6]),
                               rtol=1e-4, atol=1e-6)
    np.testing.assert_allclose(metric_dict['scaling-max'], jnp.max(g0[:, 3:6]),
                               rtol=1e-5, atol=1e-6)
    np.testing.assert_allclose(metric_dict['scaling-min'], jnp.min(g0[:, 3:6]),
                               rtol=1e-5, atol=1e-6)
    np.testing.assert_allclose(metric_dict['opacities-mean'], jnp.mean(g0[:, 10]),
                               rtol=1e-4, atol=1e-6)
    np.testing.assert_allclose(metric_dict['opacities-min'], jnp.min(g0[:, 10]),
                               rtol=1e-5, atol=1e-6)

    print("KERNEL_OK")
</pallas_src>

<mosaic_0001>
module attributes {stable_mosaic.version = 11 : i64} {
  func.func @kernel(%arg0: i32, %arg1: i32, %arg2: memref<4x8x128xf32, #tpu.memory_space<vmem>>, %arg3: memref<8x128xf32, #tpu.memory_space<vmem>>, %arg4: memref<3x8x128xf32, #tpu.memory_space<vmem>>, %arg5: memref<3x8x128xf32, #tpu.memory_space<vmem>>, %arg6: memref<8x128xf32, #tpu.memory_space<vmem>>, %arg7: memref<8x128xf32, #tpu.memory_space<vmem>>, %arg8: memref<6x8x128xf32, #tpu.memory_space<vmem>>, %arg9: memref<8x128xf32, #tpu.memory_space<vmem>>, %arg10: memref<8x128xf32, #tpu.memory_space<vmem>>, %arg11: memref<8x128xf32, #tpu.memory_space<vmem>>, %arg12: memref<8x128xf32, #tpu.memory_space<vmem>>) attributes {dimension_semantics = [#tpu.dimension_semantics<parallel>, #tpu.dimension_semantics<arbitrary>], iteration_bounds = array<i64: 1, 1>, scalar_prefetch = 0 : i64, scratch_operands = 0 : i64, tpu.core_type = #tpu.core_type<tc>, window_params = [{transform_indices = @transform_0, window_bounds = array<i64: 4, 8, 128>}, {transform_indices = @transform_1, window_bounds = array<i64: 8, 128>}, {transform_indices = @transform_2, window_bounds = array<i64: 3, 8, 128>}, {transform_indices = @transform_3, window_bounds = array<i64: 3, 8, 128>}, {transform_indices = @transform_4, window_bounds = array<i64: 8, 128>}, {transform_indices = @transform_5, window_bounds = array<i64: 8, 128>}, {transform_indices = @transform_6, window_bounds = array<i64: 6, 8, 128>}, {transform_indices = @transform_7, window_bounds = array<i64: 8, 128>}, {transform_indices = @transform_8, window_bounds = array<i64: 8, 128>}, {transform_indices = @transform_9, window_bounds = array<i64: 8, 128>}, {transform_indices = @transform_10, window_bounds = array<i64: 8, 128>}]} {
    %c0_i32 = arith.constant 0 : i32
    %0 = arith.cmpi eq, %arg1, %c0_i32 : i32
    %1 = arith.extui %0 : i1 to i32
    %c0_i32_0 = arith.constant 0 : i32
    %2 = arith.cmpi ne, %1, %c0_i32_0 : i32
    scf.if %2 {
      %cst_63 = arith.constant 0.000000e+00 : f32
      %95 = vector.broadcast %cst_63 : f32 to vector<6x8x128xf32>
      %c0_64 = arith.constant 0 : index
      %c0_65 = arith.constant 0 : index
      %c0_66 = arith.constant 0 : index
      %96 = vector.load %arg8[%c0_64, %c0_65, %c0_66] : memref<6x8x128xf32, #tpu.memory_space<vmem>>, vector<6x8x128xf32>
      tpu.vector_store %arg8[%c0_64, %c0_65, %c0_66], %95 {strides = array<i32>} : memref<6x8x128xf32, #tpu.memory_space<vmem>>, vector<6x8x128xf32>,
    } else {
    }
    %c0 = arith.constant 0 : index
    %c0_1 = arith.constant 0 : index
    %c0_2 = arith.constant 0 : index
    %3 = vector.load %arg2[%c0, %c0_1, %c0_2] : memref<4x8x128xf32, #tpu.memory_space<vmem>>, vector<4x8x128xf32>
    %c0_3 = arith.constant 0 : index
    %c0_4 = arith.constant 0 : index
    %4 = vector.load %arg3[%c0_3, %c0_4] : memref<8x128xf32, #tpu.memory_space<vmem>>, vector<8x128xf32>
    %c0_5 = arith.constant 0 : index
    %c0_6 = arith.constant 0 : index
    %c0_7 = arith.constant 0 : index
    %5 = vector.load %arg4[%c0_5, %c0_6, %c0_7] : memref<3x8x128xf32, #tpu.memory_space<vmem>>, vector<3x8x128xf32>
    %c0_8 = arith.constant 0 : index
    %c0_9 = arith.constant 0 : index
    %c0_10 = arith.constant 0 : index
    %6 = vector.load %arg5[%c0_8, %c0_9, %c0_10] : memref<3x8x128xf32, #tpu.memory_space<vmem>>, vector<3x8x128xf32>
    %c0_11 = arith.constant 0 : index
    %c0_12 = arith.constant 0 : index
    %7 = vector.load %arg6[%c0_11, %c0_12] : memref<8x128xf32, #tpu.memory_space<vmem>>, vector<8x128xf32>
    %c0_13 = arith.constant 0 : index
    %c0_14 = arith.constant 0 : index
    %8 = vector.load %arg7[%c0_13, %c0_14] : memref<8x128xf32, #tpu.memory_space<vmem>>, vector<8x128xf32>
    %9 = vector.extract_strided_slice %3 {offsets = [0, 0, 0], sizes = [1, 8, 128], strides = [1, 1, 1]} : vector<4x8x128xf32> to vector<1x8x128xf32>
    %10 = vector.shape_cast %9 : vector<1x8x128xf32> to vector<8x128xf32>
    %11 = vector.extract_strided_slice %3 {offsets = [1, 0, 0], sizes = [1, 8, 128], strides = [1, 1, 1]} : vector<4x8x128xf32> to vector<1x8x128xf32>
    %12 = vector.shape_cast %11 : vector<1x8x128xf32> to vector<8x128xf32>
    %13 = vector.extract_strided_slice %3 {offsets = [2, 0, 0], sizes = [1, 8, 128], strides = [1, 1, 1]} : vector<4x8x128xf32> to vector<1x8x128xf32>
    %14 = vector.shape_cast %13 : vector<1x8x128xf32> to vector<8x128xf32>
    %15 = vector.extract_strided_slice %3 {offsets = [3, 0, 0], sizes = [1, 8, 128], strides = [1, 1, 1]} : vector<4x8x128xf32> to vector<1x8x128xf32>
    %16 = vector.shape_cast %15 : vector<1x8x128xf32> to vector<8x128xf32>
    %17 = arith.mulf %10, %16 : vector<8x128xf32>
    %cst = arith.constant 0.000000e+00 : f32
    %18 = vector.broadcast %cst : f32 to vector<8x128xf32>
    %19 = arith.cmpf one, %17, %18 : vector<8x128xf32>
    %20 = arith.extui %19 : vector<8x128xi1> to vector<8x128xi32>
    %21 = arith.sitofp %20 : vector<8x128xi32> to vector<8x128xf32>
    %22 = arith.mulf %14, %12 : vector<8x128xf32>
    %23 = arith.mulf %22, %21 : vector<8x128xf32>
    %24 = arith.mulf %14, %12 : vector<8x128xf32>
    %25 = arith.mulf %24, %21 : vector<8x128xf32>
    %cst_15 = arith.constant 0.000000e+00 : f32
    %26 = vector.broadcast %cst_15 : f32 to vector<8x128xf32>
    %27 = arith.cmpf ogt, %4, %26 : vector<8x128xf32>
    %28 = arith.extui %27 : vector<8x128xi1> to vector<8x128xi32>
    %29 = arith.sitofp %28 : vector<8x128xi32> to vector<8x128xf32>
    %30 = arith.mulf %25, %29 : vector<8x128xf32>
    %c0_16 = arith.constant 0 : index
    %c0_17 = arith.constant 0 : index
    %31 = vector.load %arg9[%c0_16, %c0_17] : memref<8x128xf32, #tpu.memory_space<vmem>>, vector<8x128xf32>
    tpu.vector_store %arg9[%c0_16, %c0_17], %21 {strides = array<i32>} : memref<8x128xf32, #tpu.memory_space<vmem>>, vector<8x128xf32>,
    %c0_18 = arith.constant 0 : index
    %c0_19 = arith.constant 0 : index
    %32 = vector.load %arg10[%c0_18, %c0_19] : memref<8x128xf32, #tpu.memory_space<vmem>>, vector<8x128xf32>
    tpu.vector_store %arg10[%c0_18, %c0_19], %17 {strides = array<i32>} : memref<8x128xf32, #tpu.memory_space<vmem>>, vector<8x128xf32>,
    %c0_20 = arith.constant 0 : index
    %c0_21 = arith.constant 0 : index
    %33 = vector.load %arg11[%c0_20, %c0_21] : memref<8x128xf32, #tpu.memory_space<vmem>>, vector<8x128xf32>
    tpu.vector_store %arg11[%c0_20, %c0_21], %23 {strides = array<i32>} : memref<8x128xf32, #tpu.memory_space<vmem>>, vector<8x128xf32>,
    %c0_22 = arith.constant 0 : index
    %c0_23 = arith.constant 0 : index
    %34 = vector.load %arg12[%c0_22, %c0_23] : memref<8x128xf32, #tpu.memory_space<vmem>>, vector<8x128xf32>
    tpu.vector_store %arg12[%c0_22, %c0_23], %30 {strides = array<i32>} : memref<8x128xf32, #tpu.memory_space<vmem>>, vector<8x128xf32>,
    %35 = arith.subf %6, %5 : vector<3x8x128xf32>
    %36 = math.absf %35 : vector<3x8x128xf32>
    %cst_24 = arith.constant dense<0.000000e+00> : vector<8x128xf32>
    %37 = vector.multi_reduction <add>, %36, %cst_24 [0] : vector<3x8x128xf32> to vector<8x128xf32>
    %38 = arith.mulf %35, %35 : vector<3x8x128xf32>
    %cst_25 = arith.constant dense<0.000000e+00> : vector<8x128xf32>
    %39 = vector.multi_reduction <add>, %38, %cst_25 [0] : vector<3x8x128xf32> to vector<8x128xf32>
    %c0_26 = arith.constant 0 : index
    %c0_27 = arith.constant 0 : index
    %c0_28 = arith.constant 0 : index
    %40 = vector.load %arg8[%c0_26, %c0_27, %c0_28] : memref<6x8x128xf32, #tpu.memory_space<vmem>>, vector<1x8x128xf32>
    %41 = vector.shape_cast %40 : vector<1x8x128xf32> to vector<8x128xf32>
    %42 = arith.subf %7, %21 : vector<8x128xf32>
    %43 = math.absf %42 : vector<8x128xf32>
    %44 = arith.mulf %43, %23 : vector<8x128xf32>
    %45 = vector.shape_cast %44 : vector<8x128xf32> to vector<1x8x128xf32>
    %cst_29 = arith.constant dense<0.000000e+00> : vector<8x128xf32>
    %46 = vector.multi_reduction <add>, %45, %cst_29 [0] : vector<1x8x128xf32> to vector<8x128xf32>
    %47 = arith.addf %41, %46 : vector<8x128xf32>
    %c0_30 = arith.constant 0 : index
    %c0_31 = arith.constant 0 : index
    %c0_32 = arith.constant 0 : index
    %48 = vector.load %arg8[%c0_30, %c0_31, %c0_32] : memref<6x8x128xf32, #tpu.memory_space<vmem>>, vector<1x8x128xf32>
    %49 = vector.shape_cast %48 : vector<1x8x128xf32> to vector<8x128xf32>
    %50 = vector.shape_cast %47 : vector<8x128xf32> to vector<1x8x128xf32>
    tpu.vector_store %arg8[%c0_30, %c0_31, %c0_32], %50 {strides = array<i32>} : memref<6x8x128xf32, #tpu.memory_space<vmem>>, vector<1x8x128xf32>,
    %c1 = arith.constant 1 : index
    %c0_33 = arith.constant 0 : index
    %c0_34 = arith.constant 0 : index
    %51 = vector.load %arg8[%c1, %c0_33, %c0_34] : memref<6x8x128xf32, #tpu.memory_space<vmem>>, vector<1x8x128xf32>
    %52 = vector.shape_cast %51 : vector<1x8x128xf32> to vector<8x128xf32>
    %53 = arith.mulf %37, %23 : vector<8x128xf32>
    %54 = vector.shape_cast %53 : vector<8x128xf32> to vector<1x8x128xf32>
    %cst_35 = arith.constant dense<0.000000e+00> : vector<8x128xf32>
    %55 = vector.multi_reduction <add>, %54, %cst_35 [0] : vector<1x8x128xf32> to vector<8x128xf32>
    %56 = arith.addf %52, %55 : vector<8x128xf32>
    %c1_36 = arith.constant 1 : index
    %c0_37 = arith.constant 0 : index
    %c0_38 = arith.constant 0 : index
    %57 = vector.load %arg8[%c1_36, %c0_37, %c0_38] : memref<6x8x128xf32, #tpu.memory_space<vmem>>, vector<1x8x128xf32>
    %58 = vector.shape_cast %57 : vector<1x8x128xf32> to vector<8x128xf32>
    %59 = vector.shape_cast %56 : vector<8x128xf32> to vector<1x8x128xf32>
    tpu.vector_store %arg8[%c1_36, %c0_37, %c0_38], %59 {strides = array<i32>} : memref<6x8x128xf32, #tpu.memory_space<vmem>>, vector<1x8x128xf32>,
    %c2 = arith.constant 2 : index
    %c0_39 = arith.constant 0 : index
    %c0_40 = arith.constant 0 : index
    %60 = vector.load %arg8[%c2, %c0_39, %c0_40] : memref<6x8x128xf32, #tpu.memory_space<vmem>>, vector<1x8x128xf32>
    %61 = vector.shape_cast %60 : vector<1x8x128xf32> to vector<8x128xf32>
    %62 = vector.shape_cast %39 : vector<8x128xf32> to vector<1x8x128xf32>
    %cst_41 = arith.constant dense<0.000000e+00> : vector<8x128xf32>
    %63 = vector.multi_reduction <add>, %62, %cst_41 [0] : vector<1x8x128xf32> to vector<8x128xf32>
    %64 = arith.addf %61, %63 : vector<8x128xf32>
    %c2_42 = arith.constant 2 : index
    %c0_43 = arith.constant 0 : index
    %c0_44 = arith.constant 0 : index
    %65 = vector.load %arg8[%c2_42, %c0_43, %c0_44] : memref<6x8x128xf32, #tpu.memory_space<vmem>>, vector<1x8x128xf32>
    %66 = vector.shape_cast %65 : vector<1x8x128xf32> to vector<8x128xf32>
    %67 = vector.shape_cast %64 : vector<8x128xf32> to vector<1x8x128xf32>
    tpu.vector_store %arg8[%c2_42, %c0_43, %c0_44], %67 {strides = array<i32>} : memref<6x8x128xf32, #tpu.memory_space<vmem>>, vector<1x8x128xf32>,
    %c3 = arith.constant 3 : index
    %c0_45 = arith.constant 0 : index
    %c0_46 = arith.constant 0 : index
    %68 = vector.load %arg8[%c3, %c0_45, %c0_46] : memref<6x8x128xf32, #tpu.memory_space<vmem>>, vector<1x8x128xf32>
    %69 = vector.shape_cast %68 : vector<1x8x128xf32> to vector<8x128xf32>
    %70 = arith.subf %8, %4 : vector<8x128xf32>
    %71 = math.absf %70 : vector<8x128xf32>
    %72 = arith.mulf %71, %30 : vector<8x128xf32>
    %73 = vector.shape_cast %72 : vector<8x128xf32> to vector<1x8x128xf32>
    %cst_47 = arith.constant dense<0.000000e+00> : vector<8x128xf32>
    %74 = vector.multi_reduction <add>, %73, %cst_47 [0] : vector<1x8x128xf32> to vector<8x128xf32>
    %75 = arith.addf %69, %74 : vector<8x128xf32>
    %c3_48 = arith.constant 3 : index
    %c0_49 = arith.constant 0 : index
    %c0_50 = arith.constant 0 : index
    %76 = vector.load %arg8[%c3_48, %c0_49, %c0_50] : memref<6x8x128xf32, #tpu.memory_space<vmem>>, vector<1x8x128xf32>
    %77 = vector.shape_cast %76 : vector<1x8x128xf32> to vector<8x128xf32>
    %78 = vector.shape_cast %75 : vector<8x128xf32> to vector<1x8x128xf32>
    tpu.vector_store %arg8[%c3_48, %c0_49, %c0_50], %78 {strides = array<i32>} : memref<6x8x128xf32, #tpu.memory_space<vmem>>, vector<1x8x128xf32>,
    %c4 = arith.constant 4 : index
    %c0_51 = arith.constant 0 : index
    %c0_52 = arith.constant 0 : index
    %79 = vector.load %arg8[%c4, %c0_51, %c0_52] : memref<6x8x128xf32, #tpu.memory_space<vmem>>, vector<1x8x128xf32>
    %80 = vector.shape_cast %79 : vector<1x8x128xf32> to vector<8x128xf32>
    %81 = vector.shape_cast %23 : vector<8x128xf32> to vector<1x8x128xf32>
    %cst_53 = arith.constant dense<0.000000e+00> : vector<8x128xf32>
    %82 = vector.multi_reduction <add>, %81, %cst_53 [0] : vector<1x8x128xf32> to vector<8x128xf32>
    %83 = arith.addf %80, %82 : vector<8x128xf32>
    %c4_54 = arith.constant 4 : index
    %c0_55 = arith.constant 0 : index
    %c0_56 = arith.constant 0 : index
    %84 = vector.load %arg8[%c4_54, %c0_55, %c0_56] : memref<6x8x128xf32, #tpu.memory_space<vmem>>, vector<1x8x128xf32>
    %85 = vector.shape_cast %84 : vector<1x8x128xf32> to vector<8x128xf32>
    %86 = vector.shape_cast %83 : vector<8x128xf32> to vector<1x8x128xf32>
    tpu.vector_store %arg8[%c4_54, %c0_55, %c0_56], %86 {strides = array<i32>} : memref<6x8x128xf32, #tpu.memory_space<vmem>>, vector<1x8x128xf32>,
    %c5 = arith.constant 5 : index
    %c0_57 = arith.constant 0 : index
    %c0_58 = arith.constant 0 : index
    %87 = vector.load %arg8[%c5, %c0_57, %c0_58] : memref<6x8x128xf32, #tpu.memory_space<vmem>>, vector<1x8x128xf32>
    %88 = vector.shape_cast %87 : vector<1x8x128xf32> to vector<8x128xf32>
    %89 = vector.shape_cast %30 : vector<8x128xf32> to vector<1x8x128xf32>
    %cst_59 = arith.constant dense<0.000000e+00> : vector<8x128xf32>
    %90 = vector.multi_reduction <add>, %89, %cst_59 [0] : vector<1x8x128xf32> to vector<8x128xf32>
    %91 = arith.addf %88, %90 : vector<8x128xf32>
    %c5_60 = arith.constant 5 : index
    %c0_61 = arith.constant 0 : index
    %c0_62 = arith.constant 0 : index
    %92 = vector.load %arg8[%c5_60, %c0_61, %c0_62] : memref<6x8x128xf32, #tpu.memory_space<vmem>>, vector<1x8x128xf32>
    %93 = vector.shape_cast %92 : vector<1x8x128xf32> to vector<8x128xf32>
    %94 = vector.shape_cast %91 : vector<8x128xf32> to vector<1x8x128xf32>
    tpu.vector_store %arg8[%c5_60, %c0_61, %c0_62], %94 {strides = array<i32>} : memref<6x8x128xf32, #tpu.memory_space<vmem>>, vector<1x8x128xf32>,
    return
  }
  func.func @transform_0(%arg0: i32, %arg1: i32) -> (i32, i32, i32) {
    %c1_i32 = arith.constant 1 : i32
    %0 = arith.muli %arg0, %c1_i32 : i32
    %1 = arith.addi %0, %arg1 : i32
    %c0_i32 = arith.constant 0 : i32
    %c0_i32_0 = arith.constant 0 : i32
    %c0_i32_1 = arith.constant 0 : i32
    return %c0_i32, %1, %c0_i32_0 : i32, i32, i32
  }
  func.func @transform_1(%arg0: i32, %arg1: i32) -> (i32, i32) {
    %c1_i32 = arith.constant 1 : i32
    %0 = arith.muli %arg0, %c1_i32 : i32
    %1 = arith.addi %0, %arg1 : i32
    %c0_i32 = arith.constant 0 : i32
    %c0_i32_0 = arith.constant 0 : i32
    return %1, %c0_i32 : i32, i32
  }
  func.func @transform_2(%arg0: i32, %arg1: i32) -> (i32, i32, i32) {
    %c1_i32 = arith.constant 1 : i32
    %0 = arith.muli %arg0, %c1_i32 : i32
    %1 = arith.addi %0, %arg1 : i32
    %c0_i32 = arith.constant 0 : i32
    %c0_i32_0 = arith.constant 0 : i32
    %c0_i32_1 = arith.constant 0 : i32
    return %c0_i32, %1, %c0_i32_0 : i32, i32, i32
  }
  func.func @transform_3(%arg0: i32, %arg1: i32) -> (i32, i32, i32) {
    %c1_i32 = arith.constant 1 : i32
    %0 = arith.muli %arg0, %c1_i32 : i32
    %1 = arith.addi %0, %arg1 : i32
    %c0_i32 = arith.constant 0 : i32
    %c0_i32_0 = arith.constant 0 : i32
    %c0_i32_1 = arith.constant 0 : i32
    return %c0_i32, %1, %c0_i32_0 : i32, i32, i32
  }
  func.func @transform_4(%arg0: i32, %arg1: i32) -> (i32, i32) {
    %c1_i32 = arith.constant 1 : i32
    %0 = arith.muli %arg0, %c1_i32 : i32
    %1 = arith.addi %0, %arg1 : i32
    %c0_i32 = arith.constant 0 : i32
    %c0_i32_0 = arith.constant 0 : i32
    return %1, %c0_i32 : i32, i32
  }
  func.func @transform_5(%arg0: i32, %arg1: i32) -> (i32, i32) {
    %c1_i32 = arith.constant 1 : i32
    %0 = arith.muli %arg0, %c1_i32 : i32
    %1 = arith.addi %0, %arg1 : i32
    %c0_i32 = arith.constant 0 : i32
    %c0_i32_0 = arith.constant 0 : i32
    return %1, %c0_i32 : i32, i32
  }
  func.func @transform_6(%arg0: i32, %arg1: i32) -> (i32, i32, i32) {
    %c0_i32 = arith.constant 0 : i32
    %c0_i32_0 = arith.constant 0 : i32
    %c0_i32_1 = arith.constant 0 : i32
    return %arg0, %c0_i32, %c0_i32_0 : i32, i32, i32
  }
  func.func @transform_7(%arg0: i32, %arg1: i32) -> (i32, i32) {
    %c1_i32 = arith.constant 1 : i32
    %0 = arith.muli %arg0, %c1_i32 : i32
    %1 = arith.addi %0, %arg1 : i32
    %c0_i32 = arith.constant 0 : i32
    %c0_i32_0 = arith.constant 0 : i32
    return %1, %c0_i32 : i32, i32
  }
  func.func @transform_8(%arg0: i32, %arg1: i32) -> (i32, i32) {
    %c1_i32 = arith.constant 1 : i32
    %0 = arith.muli %arg0, %c1_i32 : i32
    %1 = arith.addi %0, %arg1 : i32
    %c0_i32 = arith.constant 0 : i32
    %c0_i32_0 = arith.constant 0 : i32
    return %1, %c0_i32 : i32, i32
  }
  func.func @transform_9(%arg0: i32, %arg1: i32) -> (i32, i32) {
    %c1_i32 = arith.constant 1 : i32
    %0 = arith.muli %arg0, %c1_i32 : i32
    %1 = arith.addi %0, %arg1 : i32
    %c0_i32 = arith.constant 0 : i32
    %c0_i32_0 = arith.constant 0 : i32
    return %1, %c0_i32 : i32, i32
  }
  func.func @transform_10(%arg0: i32, %arg1: i32) -> (i32, i32) {
    %c1_i32 = arith.constant 1 : i32
    %0 = arith.muli %arg0, %c1_i32 : i32
    %1 = arith.addi %0, %arg1 : i32
    %c0_i32 = arith.constant 0 : i32
    %c0_i32_0 = arith.constant 0 : i32
    return %1, %c0_i32 : i32, i32
  }
}

</mosaic_0001>

<llo_original>
// kernel: tpu_custom_call.1
$region0: #{tpu_custom_call.1}
  #allocation0 [shape = 'u32[]', space=smem, size = 0x4, offset = 0x4, fixed_abs, tag = 'smem constant byte address 0x4 - core index']
  #allocation1 [shape = 'u32[144,128]{1,0:T(1,128)}', space=vmem, size = 0x12000, scoped, tag = 'internal scratch']
  %s0 = inlined_call_operand.hbm [shape: f32[4,8,128], index: 0, kind: input, shape index: {}]
  %s1 = inlined_call_operand.hbm [shape: f32[8,128], index: 1, kind: input, shape index: {}]
  %s2 = inlined_call_operand.hbm [shape: f32[3,8,128], index: 2, kind: input, shape index: {}]
  %s3 = inlined_call_operand.hbm [shape: f32[3,8,128], index: 3, kind: input, shape index: {}]
  %s4 = inlined_call_operand.vmem [shape: f32[8,128], index: 4, kind: input, shape index: {}]
  %s5 = inlined_call_operand.vmem [shape: f32[8,128], index: 5, kind: input, shape index: {}]
  %s6 = inlined_call_operand.hbm [shape: f32[6,8,128], index: 6, kind: output, shape index: {0}]
  %s7 = inlined_call_operand.hbm [shape: f32[8,128], index: 7, kind: output, shape index: {1}]
  %s8 = inlined_call_operand.hbm [shape: f32[8,128], index: 8, kind: output, shape index: {2}]
  %s9 = inlined_call_operand.hbm [shape: f32[8,128], index: 9, kind: output, shape index: {3}]
  %s10 = inlined_call_operand.hbm [shape: f32[8,128], index: 10, kind: output, shape index: {4}]
  %11 = xla_tuple %s6, %s7, %s8, %s9, %s10
  %s12 = sld [smem:[#allocation0]]
  $region86: #{tpu_custom_call.1} parent=0
    _
  %s14 = ssub.s32 1, %s12
  %s15 = scalar_select 0, %s14, %s12
  $region1: #{tpu_custom_call.1} parent=0
    #allocation2 [shape = 'u8[16384]{0}', space=vmem, size = 0x4000, scoped, tag = 'input window, operand 0, single buffered']
    #allocation3 [shape = 's32[1]{0}', space=sflag, size = 0x4, scoped, tag = 'scoped memory for tpu_custom_call.1']
    #allocation4 [shape = 's32[1]{0}', space=sflag, size = 0x4, scoped, tag = 'scoped memory for tpu_custom_call.1']
    #allocation5 [shape = 'u8[4096]{0}', space=vmem, size = 0x1000, scoped, tag = 'input window, operand 1, single buffered']
    #allocation6 [shape = 's32[1]{0}', space=sflag, size = 0x4, scoped, tag = 'scoped memory for tpu_custom_call.1']
    #allocation7 [shape = 'u8[12288]{0}', space=vmem, size = 0x3000, scoped, tag = 'input window, operand 2, single buffered']
    #allocation8 [shape = 'u8[12288]{0}', space=vmem, size = 0x3000, scoped, tag = 'input window, operand 3, single buffered']
    #allocation9 [shape = 's32[1]{0}', space=sflag, size = 0x4, scoped, tag = 'scoped memory for tpu_custom_call.1']
    #allocation10 [shape = 'u8[24576]{0}', space=vmem, size = 0x6000, scoped, tag = 'output window, operand 0, single buffered']
    #allocation11 [shape = 'u8[4096]{0}', space=vmem, size = 0x1000, scoped, tag = 'output window, operand 1, single buffered']
    #allocation12 [shape = 's32[1]{0}', space=sflag, size = 0x4, scoped, tag = 'scoped memory for tpu_custom_call.1']
    #allocation13 [shape = 'u8[4096]{0}', space=vmem, size = 0x1000, scoped, tag = 'output window, operand 2, single buffered']
    #allocation14 [shape = 'u8[4096]{0}', space=vmem, size = 0x1000, scoped, tag = 'output window, operand 3, single buffered']
    #allocation15 [shape = 's32[1]{0}', space=sflag, size = 0x4, scoped, tag = 'scoped memory for tpu_custom_call.1']
    #allocation16 [shape = 'u8[4096]{0}', space=vmem, size = 0x1000, scoped, tag = 'output window, operand 4, single buffered']
    %16 = vsyncpa [#allocation3], 0
    %17 = vsyncpa [#allocation6], 0
    %18 = vsyncpa [#allocation9], 0
    %19 = vsyncpa [#allocation4], 0
    %20 = vsyncpa [#allocation12], 0
    %21 = vsyncpa [#allocation15], 0
    // Predicated region
    $region2: #{tpu_custom_call.1} parent=1 // pred_check
      _
    $region3: #{tpu_custom_call.1} parent=1 // pred_check_branch
      %23 = sbr.rel (0) target = $region5
    $region4: #{tpu_custom_call.1} parent=1 // pred_region
      %s24 = sadd.s32 0, 0
      %s26 = ssub.s32 512, 512
      %27 = vsyncadd [#allocation3], %s26
      %s28 = smul.addr %s24, 128
      %s29 = scalar_lea.hbm %s0, %s28
      %s30 = sshll.u32 [#allocation2], 4
      %s31 = int_to_ptr.vmem [resolvable:$true] %s30
      %36 = dma.hbm_to_vmem [thread:$0]  %s29, 512, %s31, [#allocation3], 128, 128, 8
    $region5: #{tpu_custom_call.1} parent=1 // pred_fallthru
      _
    // Predicated region
    $region6: #{tpu_custom_call.1} parent=1 // pred_check
      _
    $region7: #{tpu_custom_call.1} parent=1 // pred_check_branch
      %38 = sbr.rel (0) target = $region9
    $region8: #{tpu_custom_call.1} parent=1 // pred_region
      %s39 = sadd.s32 0, 0
      %s41 = ssub.s32 128, 128
      %42 = vsyncadd [#allocation6], %s41
      %s43 = smul.addr %s39, 128
      %s44 = scalar_lea.hbm %s1, %s43
      %s46 = sshll.u32 [#allocation5], 4
      %s47 = int_to_ptr.vmem [resolvable:$true] %s46
      %49 = dma.hbm_to_vmem [thread:$0]  %s44, 128, %s47, [#allocation6]
    $region9: #{tpu_custom_call.1} parent=1 // pred_fallthru
      _
    // Predicated region
    $region10: #{tpu_custom_call.1} parent=1 // pred_check
      _
    $region11: #{tpu_custom_call.1} parent=1 // pred_check_branch
      %51 = sbr.rel (0) target = $region13
    $region12: #{tpu_custom_call.1} parent=1 // pred_region
      %s52 = sadd.s32 0, 0
      %s54 = ssub.s32 384, 384
      %55 = vsyncadd [#allocation6], %s54
      %s56 = smul.addr %s52, 128
      %s57 = scalar_lea.hbm %s2, %s56
      %s58 = sshll.u32 [#allocation7], 4
      %s59 = int_to_ptr.vmem [resolvable:$true] %s58
      %64 = dma.hbm_to_vmem [thread:$0]  %s57, 384, %s59, [#allocation6], 128, 128, 8
    $region13: #{tpu_custom_call.1} parent=1 // pred_fallthru
      _
    // Predicated region
    $region14: #{tpu_custom_call.1} parent=1 // pred_check
      _
    $region15: #{tpu_custom_call.1} parent=1 // pred_check_branch
      %66 = sbr.rel (0) target = $region17
    $region16: #{tpu_custom_call.1} parent=1 // pred_region
      %s67 = sadd.s32 0, 0
      %s69 = ssub.s32 384, 384
      %70 = vsyncadd [#allocation9], %s69
      %s71 = smul.addr %s67, 128
      %s72 = scalar_lea.hbm %s3, %s71
      %s73 = sshll.u32 [#allocation8], 4
      %s74 = int_to_ptr.vmem [resolvable:$true] %s73
      %79 = dma.hbm_to_vmem [thread:$0]  %s72, 384, %s74, [#allocation9], 128, 128, 8
    $region17: #{tpu_custom_call.1} parent=1 // pred_fallthru
      _
    // Predicated region
    $region18: #{tpu_custom_call.1} parent=1 // pred_check
      _
    $region19: #{tpu_custom_call.1} parent=1 // pred_check_branch
      %81 = sbr.rel (0) target = $region21
    $region20: #{tpu_custom_call.1} parent=1 // pred_region
      %s82 = sadd.s32 0, 0
      %p83 = scmp.lt.s32.totalorder %s82, 0
      %s84 = scalar_select %p83, %s82, 0
      %s85 = smul.addr %s84, 8
      %s86 = scalar_lea.vmem %s4, %s85
      %s87 = sadd.s32 0, 0
    $region21: #{tpu_custom_call.1} parent=1 // pred_fallthru
      _
    // Predicated region
    $region22: #{tpu_custom_call.1} parent=1 // pred_check
      _
    $region23: #{tpu_custom_call.1} parent=1 // pred_check_branch
      %89 = sbr.rel (0) target = $region25
    $region24: #{tpu_custom_call.1} parent=1 // pred_region
      %s90 = sadd.s32 0, 0
      %p91 = scmp.lt.s32.totalorder %s90, 0
      %s92 = scalar_select %p91, %s90, 0
      %s93 = smul.addr %s92, 8
      %s94 = scalar_lea.vmem %s5, %s93
      %s95 = sadd.s32 0, 0
    $region25: #{tpu_custom_call.1} parent=1 // pred_fallthru
      _
    // Predicated region
    $region26: #{tpu_custom_call.1} parent=1 // pred_check
      _
    $region27: #{tpu_custom_call.1} parent=1 // pred_check_branch
      %97 = sbr.rel (0) target = $region29
    $region28: #{tpu_custom_call.1} parent=1 // pred_region
      %98 = dma.done [#allocation3], 512
    $region29: #{tpu_custom_call.1} parent=1 // pred_fallthru
      _
    // Predicated region
    $region30: #{tpu_custom_call.1} parent=1 // pred_check
      _
    $region31: #{tpu_custom_call.1} parent=1 // pred_check_branch
      %100 = sbr.rel (0) target = $region33
    $region32: #{tpu_custom_call.1} parent=1 // pred_region
      %101 = dma.done [#allocation6], 128
    $region33: #{tpu_custom_call.1} parent=1 // pred_fallthru
      _
    // Predicated region
    $region34: #{tpu_custom_call.1} parent=1 // pred_check
      _
    $region35: #{tpu_custom_call.1} parent=1 // pred_check_branch
      %103 = sbr.rel (0) target = $region37
    $region36: #{tpu_custom_call.1} parent=1 // pred_region
      %104 = dma.done [#allocation6], 384
    $region37: #{tpu_custom_call.1} parent=1 // pred_fallthru
      _
    // Predicated region
    $region38: #{tpu_custom_call.1} parent=1 // pred_check
      _
    $region39: #{tpu_custom_call.1} parent=1 // pred_check_branch
      %106 = sbr.rel (0) target = $region41
    $region40: #{tpu_custom_call.1} parent=1 // pred_region
      %107 = dma.done [#allocation9], 384
    $region41: #{tpu_custom_call.1} parent=1 // pred_fallthru
      _
    %s108 = sadd.s32 0, 0
    %p109 = scmp.lt.s32.totalorder %s108, 0
    %s110 = scalar_select %p109, %s108, 0
    %s111 = smul.addr %s110, 8
    %s112 = scalar_lea.vmem %s4, %s111
    %s113 = sadd.s32 0, 0
    %p114 = scmp.lt.s32.totalorder %s113, 0
    %s115 = scalar_select %p114, %s113, 0
    %s116 = smul.addr %s115, 8
    %s117 = scalar_lea.vmem %s5, %s116
    %s118 = sadd.s32 0, 0
    %s119 = sadd.s32 0, 0
    %s120 = sadd.s32 0, 0
    %s121 = sadd.s32 0, 0
    %s122 = sadd.s32 0, 0
    %p123 = scmp.lt.s32.totalorder %s122, 0
    %s124 = scalar_select %p123, %s122, 0
    %s125 = smul.addr %s124, 8
    %s126 = scalar_lea.vmem %s4, %s125
    %s127 = sadd.s32 0, 0
    %s128 = sadd.s32 0, 0
    %p129 = scmp.lt.s32.totalorder %s128, 0
    %s130 = scalar_select %p129, %s128, 0
    %s131 = smul.addr %s130, 8
    %s132 = scalar_lea.vmem %s5, %s131
    %s133 = sadd.s32 0, 0
    %s134 = sadd.s32 0, 0
    %s135 = sadd.s32 0, 0
    %s136 = sadd.s32 0, 0
    %s137 = sadd.s32 0, 0
    %p138 = scmp.eq.s32.totalorder 0, 0
    // Predicated region
    $region42: #{tpu_custom_call.1} parent=1 // pred_check
      %p139 = pneg %p138
    $region43: #{tpu_custom_call.1} parent=1 // pred_check_branch
      %141 = sbr.rel (%p139) target = $region45
    $region44: #{tpu_custom_call.1} parent=1 // pred_region
      %142 = vst [vmem:[#allocation10] sm:$0xff] 0.0
      %143 = vst [vmem:[#allocation10 + $0x8] sm:$0xff] 0.0
      %144 = vst [vmem:[#allocation10 + $0x10] sm:$0xff] 0.0
      %145 = vst [vmem:[#allocation10 + $0x18] sm:$0xff] 0.0
      %146 = vst [vmem:[#allocation10 + $0x20] sm:$0xff] 0.0
      %147 = vst [vmem:[#allocation10 + $0x28] sm:$0xff] 0.0
    $region45: #{tpu_custom_call.1} parent=1 // pred_fallthru
      _
    %v148 = vld [vmem:[#allocation2] sm:$0xff]
    %v149 = vld [vmem:[#allocation2 + $0x8] sm:$0xff]
    %v150 = vld [vmem:[#allocation2 + $0x10] sm:$0xff]
    %v151 = vld [vmem:[#allocation2 + $0x18] sm:$0xff]
    %v152 = vld [vmem:[#allocation5] sm:$0xff]
    %v153 = vld [vmem:[#allocation7] sm:$0xff]
    %v154 = vld [vmem:[#allocation7 + $0x8] sm:$0xff]
    %v155 = vld [vmem:[#allocation7 + $0x10] sm:$0xff]
    %v156 = vld [vmem:[#allocation8] sm:$0xff]
    %v157 = vld [vmem:[#allocation8 + $0x8] sm:$0xff]
    %v158 = vld [vmem:[#allocation8 + $0x10] sm:$0xff]
    %v159 = vld [vmem:[%s126] sm:$0xff]
    %v160 = vld [vmem:[%s132] sm:$0xff]
    %v161 = vmul.f32 %v148, %v151
    %vm162 = vcmp.ne.f32.partialorder %v161, 0.0
    %v163 = vsel %vm162, 1, 0
    %v164 = vcvt.s32.f32 %v163
    %v165 = vmul.f32 %v150, %v149
    %v166 = vmul.f32 %v165, %v164
    %vm167 = vcmp.gt.f32.partialorder %v152, 0.0
    %v168 = vsel %vm167, 1, 0
    %v169 = vcvt.s32.f32 %v168
    %v170 = vmul.f32 %v166, %v169
    %171 = vst [vmem:[#allocation11] sm:$0xff] %v164
    %172 = vst [vmem:[#allocation13] sm:$0xff] %v161
    %173 = vst [vmem:[#allocation14] sm:$0xff] %v166
    %174 = vst [vmem:[#allocation16] sm:$0xff] %v170
    %v175 = vsub.f32 %v156, %v153
    %v176 = vsub.f32 %v157, %v154
    %v177 = vsub.f32 %v158, %v155
    %v178 = vand.u32 2147483647, %v175
    %v179 = vand.u32 2147483647, %v176
    %v180 = vand.u32 2147483647, %v177
    %v181 = vadd.f32 %v178, %v179
    %v182 = vadd.f32 %v181, %v180
    %v183 = vmul.f32 %v175, %v175
    %v184 = vmul.f32 %v176, %v176
    %v185 = vmul.f32 %v177, %v177
    %v186 = vadd.f32 %v183, %v184
    %v187 = vadd.f32 %v186, %v185
    %v188 = vld [vmem:[#allocation10] sm:$0xff]
    %v189 = vsub.f32 %v159, %v164
    %v190 = vand.u32 2147483647, %v189
    %v191 = vmul.f32 %v190, %v166
    %v192 = vadd.f32 %v191, 0.0
    %v193 = vadd.f32 %v188, %v192
    %194 = vst [vmem:[#allocation10] sm:$0xff] %v193
    %s195 = scalar_lea.vmem [#allocation10], 8
    %v196 = vld [vmem:[%s195] sm:$0xff]
    %v197 = vmul.f32 %v182, %v166
    %v198 = vadd.f32 %v197, 0.0
    %v199 = vadd.f32 %v196, %v198
    %200 = vst [vmem:[%s195] sm:$0xff] %v199
    %s201 = scalar_lea.vmem [#allocation10], 16
    %v202 = vld [vmem:[%s201] sm:$0xff]
    %v203 = vadd.f32 %v187, 0.0
    %v204 = vadd.f32 %v202, %v203
    %205 = vst [vmem:[%s201] sm:$0xff] %v204
    %s206 = scalar_lea.vmem [#allocation10], 24
    %v207 = vld [vmem:[%s206] sm:$0xff]
    %v208 = vsub.f32 %v160, %v152
    %v209 = vand.u32 2147483647, %v208
    %v210 = vmul.f32 %v209, %v170
    %v211 = vadd.f32 %v210, 0.0
    %v212 = vadd.f32 %v207, %v211
    %213 = vst [vmem:[%s206] sm:$0xff] %v212
    %s214 = scalar_lea.vmem [#allocation10], 32
    %v215 = vld [vmem:[%s214] sm:$0xff]
    %v216 = vadd.f32 %v166, 0.0
    %v217 = vadd.f32 %v215, %v216
    %218 = vst [vmem:[%s214] sm:$0xff] %v217
    %s219 = scalar_lea.vmem [#allocation10], 40
    %v220 = vld [vmem:[%s219] sm:$0xff]
    %v221 = vadd.f32 %v170, 0.0
    %v222 = vadd.f32 %v220, %v221
    %223 = vst [vmem:[%s219] sm:$0xff] %v222
    // Predicated region
    $region46: #{tpu_custom_call.1} parent=1 // pred_check
      _
    $region47: #{tpu_custom_call.1} parent=1 // pred_check_branch
      %225 = sbr.rel (0) target = $region49
    $region48: #{tpu_custom_call.1} parent=1 // pred_region
      %s227 = ssub.s32 768, 768
      %228 = vsyncadd [#allocation4], %s227
      %s229 = sshll.u32 [#allocation10], 4
      %s230 = int_to_ptr.vmem [resolvable:$true] %s229
      %235 = dma.vmem_to_hbm [thread:$0]  %s230, 768, %s6, [#allocation4], 128, 128, 8
    $region49: #{tpu_custom_call.1} parent=1 // pred_fallthru
      _
    // Predicated region
    $region50: #{tpu_custom_call.1} parent=1 // pred_check
      _
    $region51: #{tpu_custom_call.1} parent=1 // pred_check_branch
      %237 = sbr.rel (0) target = $region53
    $region52: #{tpu_custom_call.1} parent=1 // pred_region
      %s238 = sadd.s32 0, 0
      %s240 = ssub.s32 128, 128
      %241 = vsyncadd [#allocation12], %s240
      %s242 = smul.addr %s238, 128
      %s243 = scalar_lea.hbm %s7, %s242
      %s245 = sshll.u32 [#allocation11], 4
      %s246 = int_to_ptr.vmem [resolvable:$true] %s245
      %248 = dma.vmem_to_hbm [thread:$0]  %s246, 128, %s243, [#allocation12]
    $region53: #{tpu_custom_call.1} parent=1 // pred_fallthru
      _
    // Predicated region
    $region54: #{tpu_custom_call.1} parent=1 // pred_check
      _
    $region55: #{tpu_custom_call.1} parent=1 // pred_check_branch
      %250 = sbr.rel (0) target = $region57
    $region56: #{tpu_custom_call.1} parent=1 // pred_region
      %s251 = sadd.s32 0, 0
      %s253 = ssub.s32 128, 128
      %254 = vsyncadd [#allocation12], %s253
      %s255 = smul.addr %s251, 128
      %s256 = scalar_lea.hbm %s8, %s255
      %s258 = sshll.u32 [#allocation13], 4
      %s259 = int_to_ptr.vmem [resolvable:$true] %s258
      %261 = dma.vmem_to_hbm [thread:$0]  %s259, 128, %s256, [#allocation12]
    $region57: #{tpu_custom_call.1} parent=1 // pred_fallthru
      _
    // Predicated region
    $region58: #{tpu_custom_call.1} parent=1 // pred_check
      _
    $region59: #{tpu_custom_call.1} parent=1 // pred_check_branch
      %263 = sbr.rel (0) target = $region61
    $region60: #{tpu_custom_call.1} parent=1 // pred_region
      %s264 = sadd.s32 0, 0
      %s266 = ssub.s32 128, 128
      %267 = vsyncadd [#allocation15], %s266
      %s268 = smul.addr %s264, 128
      %s269 = scalar_lea.hbm %s9, %s268
      %s271 = sshll.u32 [#allocation14], 4
      %s272 = int_to_ptr.vmem [resolvable:$true] %s271
      %274 = dma.vmem_to_hbm [thread:$0]  %s272, 128, %s269, [#allocation15]
    $region61: #{tpu_custom_call.1} parent=1 // pred_fallthru
      _
    // Predicated region
    $region62: #{tpu_custom_call.1} parent=1 // pred_check
      _
    $region63: #{tpu_custom_call.1} parent=1 // pred_check_branch
      %276 = sbr.rel (0) target = $region65
    $region64: #{tpu_custom_call.1} parent=1 // pred_region
      %s277 = sadd.s32 0, 0
      %s279 = ssub.s32 128, 128
      %280 = vsyncadd [#allocation15], %s279
      %s281 = smul.addr %s277, 128
      %s282 = scalar_lea.hbm %s10, %s281
      %s284 = sshll.u32 [#allocation16], 4
      %s285 = int_to_ptr.vmem [resolvable:$true] %s284
      %287 = dma.vmem_to_hbm [thread:$0]  %s285, 128, %s282, [#allocation15]
    $region65: #{tpu_custom_call.1} parent=1 // pred_fallthru
      _
    // Predicated region
    $region66: #{tpu_custom_call.1} parent=1 // pred_check
      _
    $region67: #{tpu_custom_call.1} parent=1 // pred_check_branch
      %289 = sbr.rel (0) target = $region69
    $region68: #{tpu_custom_call.1} parent=1 // pred_region
      %290 = dma.done [#allocation4], 768
    $region69: #{tpu_custom_call.1} parent=1 // pred_fallthru
      _
    // Predicated region
    $region70: #{tpu_custom_call.1} parent=1 // pred_check
      _
    $region71: #{tpu_custom_call.1} parent=1 // pred_check_branch
      %292 = sbr.rel (0) target = $region73
    $region72: #{tpu_custom_call.1} parent=1 // pred_region
      %293 = dma.done [#allocation12], 128
    $region73: #{tpu_custom_call.1} parent=1 // pred_fallthru
      _
    // Predicated region
    $region74: #{tpu_custom_call.1} parent=1 // pred_check
      _
    $region75: #{tpu_custom_call.1} parent=1 // pred_check_branch
      %295 = sbr.rel (0) target = $region77
    $region76: #{tpu_custom_call.1} parent=1 // pred_region
      %296 = dma.done [#allocation12], 128
    $region77: #{tpu_custom_call.1} parent=1 // pred_fallthru
      _
    // Predicated region
    $region78: #{tpu_custom_call.1} parent=1 // pred_check
      _
    $region79: #{tpu_custom_call.1} parent=1 // pred_check_branch
      %298 = sbr.rel (0) target = $region81
    $region80: #{tpu_custom_call.1} parent=1 // pred_region
      %299 = dma.done [#allocation15], 128
    $region81: #{tpu_custom_call.1} parent=1 // pred_fallthru
      _
    // Predicated region
    $region82: #{tpu_custom_call.1} parent=1 // pred_check
      _
    $region83: #{tpu_custom_call.1} parent=1 // pred_check_branch
      %301 = sbr.rel (0) target = $region85
    $region84: #{tpu_custom_call.1} parent=1 // pred_region
      %302 = dma.done [#allocation15], 128
    $region85: #{tpu_custom_call.1} parent=1 // pred_fallthru
      _
    %303 = vsyncpa [#allocation3], 1
    %304 = vsyncpa [#allocation6], 1
    %305 = vsyncpa [#allocation9], 1
    %306 = vsyncpa [#allocation4], 1
    %307 = vsyncpa [#allocation12], 1
    %308 = vsyncpa [#allocation15], 1

</llo_original>
